<compile_context>
chip_gen: v7x
topology: tpu7x:2x2x1
jax: 0.10.0
libtpu: 0.0.40
codegen_flags: <defaults>
</compile_context>

<pallas_src>
import functools

import jax
import jax.numpy as jnp
from jax.experimental import pallas as pl
from jax.experimental.pallas import tpu as pltpu

NUM_MODELS = 3
IN_CHANNELS = 3
NUM_CLASSES = 2


def _default_tile_max_rows():
    """Per-chip max pixel rows (of 128 lanes each) per grid step.

    bytes/row ~= (IN_CHANNELS + NUM_CLASSES) * 128 * 4 = 2560; x2 for the
    double-buffered pipeline.  Sized to stay inside the scoped-VMEM default
    (v5e 16 MiB, v6e 32 MiB, v7x 32 MiB) with headroom.
    """
    try:
        kind = jax.devices()[0].device_kind.lower()
    except Exception:  # no device info -> conservative default
        return 1024
    if "v7" in kind:
        return 4096   # ~20 MiB double-buffered; 3.2 TB/s HBM wants big steps
    if "v6" in kind:
        return 2048   # ~10 MiB double-buffered
    return 1024       # v5e & older: ~5 MiB double-buffered


def _ensemble_head_kernel(params_ref, x_ref, o_ref):
    """Fused (collapsed) ensemble head on one lane-dense pixel tile.

    params_ref : SMEM (NUM_CLASSES*IN_CHANNELS + NUM_CLASSES,) f32
                 params[c*IN_CHANNELS + k]            = W_eff[k, c]
                 params[NUM_CLASSES*IN_CHANNELS + c]  = b_eff[c]
    x_ref      : VMEM (IN_CHANNELS,  TILE_ROWS, 128)  input pixels (NCHW slab)
    o_ref      : VMEM (NUM_CLASSES, TILE_ROWS, 128)   averaged ensemble logits
    """
    # Load each channel once (vld halved vs reloading per class; VPU has slack).
    xs = [x_ref[k].astype(jnp.float32) for k in range(IN_CHANNELS)]
    for c in range(NUM_CLASSES):  # tiny static loops -> fully unrolled
        acc = xs[0] * params_ref[c * IN_CHANNELS + 0]
        for k in range(1, IN_CHANNELS):
            acc = acc + xs[k] * params_ref[c * IN_CHANNELS + k]
        acc = acc + params_ref[NUM_CLASSES * IN_CHANNELS + c]
        o_ref[c] = acc.astype(o_ref.dtype)


@functools.partial(jax.jit, static_argnames=("max_tile_rows",))
def binary_ensemble_forward(x_nchw, weights, biases, max_tile_rows=None):
    """Ensemble forward.

    x_nchw : (N, 3, H, W)                 -- same NCHW input as the PyTorch module
    weights: (NUM_MODELS, 3, NUM_CLASSES) per-model head weights
    biases : (NUM_MODELS, NUM_CLASSES)    per-model head biases
    returns: (N, NUM_CLASSES, H, W) in x_nchw.dtype (averaged ensemble logits)
    """
    n, c_in, h, w = x_nchw.shape
    assert c_in == IN_CHANNELS
    out_dtype = x_nchw.dtype  # fp16 in -> fp16 out (precisionMode-style)

    # Collapse the ensemble (linear op): mean of heads == head with mean params.
    w_eff = jnp.mean(weights.astype(jnp.float32), axis=0)          # (C_in, NC)
    b_eff = jnp.mean(biases.astype(jnp.float32), axis=0)           # (NC,)
    params = jnp.concatenate(
        [jnp.transpose(w_eff).reshape(-1), b_eff]).astype(jnp.float32)

    # Lane-dense view of the pixel axis: (rows, 128) -- pixels on lanes,
    # rows on sublanes.  Only pad the ragged tail up to the next (8,128) tile
    # (skipped entirely for aligned images); the partial last pixel-tile is
    # handled by Pallas OOB masking, NOT by padding up to a tile_rows multiple.
    hw = h * w
    rows_total = pl.cdiv(hw, 128)
    rows_padded = ((rows_total + 7) // 8) * 8
    hw_padded = rows_padded * 128

    x_flat = x_nchw.reshape(n, c_in, hw)
    needs_pad = hw_padded != hw
    if needs_pad:
        x_flat = jnp.pad(x_flat, ((0, 0), (0, 0), (0, hw_padded - hw)))
    x_tiled = x_flat.reshape(n, c_in, rows_padded, 128)             # free reshape

    if max_tile_rows is None:
        max_tile_rows = _default_tile_max_rows()
    tile_rows = max(8, (min(int(max_tile_rows), rows_padded) // 8) * 8)
    num_row_tiles = pl.cdiv(rows_padded, tile_rows)
    # Dual-TC chips (v7x): make sure there are >= 2 parallel grid steps.
    if n * num_row_tiles < 2 and rows_padded >= 16:
        tile_rows = max(8, ((rows_padded // 2) // 8) * 8)
        num_row_tiles = pl.cdiv(rows_padded, tile_rows)

    grid = (n, num_row_tiles)

    x_bytes = n * c_in * rows_padded * 128 * jnp.dtype(x_nchw.dtype).itemsize
    o_bytes = n * NUM_CLASSES * rows_padded * 128 * jnp.dtype(out_dtype).itemsize
    cost = pl.CostEstimate(
        flops=2 * n * rows_padded * 128 * NUM_CLASSES * IN_CHANNELS,
        transcendentals=0,
        bytes_accessed=x_bytes + o_bytes + params.size * 4)

    out = pl.pallas_call(
        _ensemble_head_kernel,
        out_shape=jax.ShapeDtypeStruct(
            (n, NUM_CLASSES, rows_padded, 128), out_dtype),
        grid_spec=pltpu.PrefetchScalarGridSpec(
            num_scalar_prefetch=0,
            grid=grid,
            in_specs=[
                # 8 effective-head scalars, resident in SMEM.
                pl.BlockSpec(memory_space=pltpu.MemorySpace.SMEM),
                # Lane-dense pixel tile; batch dim squeezed out of the kernel.
                pl.BlockSpec((None, c_in, tile_rows, 128),
                             lambda b, p: (b, 0, p, 0)),
            ],
            out_specs=pl.BlockSpec((None, NUM_CLASSES, tile_rows, 128),
                                   lambda b, p: (b, 0, p, 0)),
        ),
        compiler_params=pltpu.CompilerParams(
            dimension_semantics=("parallel", "parallel")),
        cost_estimate=cost,
    )(params, x_tiled)

    if needs_pad:
        out = out.reshape(n, NUM_CLASSES, hw_padded)[:, :, :hw]
    return out.reshape(n, NUM_CLASSES, h, w)


def _reference(x_nchw, weights, biases):
    """Pure-JAX reference: literal per-model heads then ensemble mean."""
    n, c_in, h, w = x_nchw.shape
    x_pix = jnp.transpose(x_nchw, (0, 2, 3, 1)).reshape(n * h * w, c_in)
    outs = [x_pix.astype(jnp.float32) @ weights[m] + biases[m]
            for m in range(NUM_MODELS)]
    mean = jnp.mean(jnp.stack(outs, axis=0), axis=0)
    return jnp.transpose(mean.reshape(n, h, w, NUM_CLASSES), (0, 3, 1, 2))


if __name__ == "__main__":
    key = jax.random.PRNGKey(0)
    kx, kw, kb, kx2, kx3 = jax.random.split(key, 5)

    weights = 0.1 * jax.random.normal(
        kw, (NUM_MODELS, IN_CHANNELS, NUM_CLASSES), dtype=jnp.float32)
    biases = 0.1 * jax.random.normal(
        kb, (NUM_MODELS, NUM_CLASSES), dtype=jnp.float32)

    # Case 1: small shapes consistent with the module: batch=2, 3ch, 16x16.
    x = jax.random.normal(kx, (2, IN_CHANNELS, 16, 16), dtype=jnp.float32)
    out = jax.block_until_ready(binary_ensemble_forward(x, weights, biases))
    ref = _reference(x, weights, biases)
    assert out.shape == (2, NUM_CLASSES, 16, 16), out.shape
    assert jnp.allclose(out, ref, atol=1e-5, rtol=1e-5), float(
        jnp.max(jnp.abs(out - ref)))

    # Case 2: ragged H*W (1600 -> pad to 16 lane-rows) + multi-tile grid.
    x2 = jax.random.normal(kx2, (2, IN_CHANNELS, 40, 40), dtype=jnp.float32)
    out2 = jax.block_until_ready(
        binary_ensemble_forward(x2, weights, biases, max_tile_rows=8))
    ref2 = _reference(x2, weights, biases)
    assert out2.shape == (2, NUM_CLASSES, 40, 40), out2.shape
    assert jnp.allclose(out2, ref2, atol=1e-5, rtol=1e-5), float(
        jnp.max(jnp.abs(out2 - ref2)))

    # Case 3: aligned H*W (64x64 -> 32 lane-rows, no wrapper pad/slice) with a
    # tile of 24 rows -> last block is partial and relies on Pallas OOB masking.
    x3 = jax.random.normal(kx3, (2, IN_CHANNELS, 64, 64), dtype=jnp.float32)
    out3 = jax.block_until_ready(
        binary_ensemble_forward(x3, weights, biases, max_tile_rows=24))
    ref3 = _reference(x3, weights, biases)
    assert out3.shape == (2, NUM_CLASSES, 64, 64), out3.shape
    assert jnp.allclose(out3, ref3, atol=1e-5, rtol=1e-5), float(
        jnp.max(jnp.abs(out3 - ref3)))

    print("KERNEL_OK")
</pallas_src>

<mosaic_0001>
module attributes {stable_mosaic.version = 11 : i64} {
  func.func @_ensemble_head_kernel(%arg0: i32, %arg1: i32, %arg2: memref<8xf32, #tpu.memory_space<smem>>, %arg3: memref<1x3x8x128xf32, #tpu.memory_space<vmem>>, %arg4: memref<1x2x8x128xf32, #tpu.memory_space<vmem>>) attributes {dimension_semantics = [#tpu.dimension_semantics<parallel>, #tpu.dimension_semantics<parallel>], iteration_bounds = array<i64: 2, 1>, scalar_prefetch = 0 : i64, scratch_operands = 0 : i64, tpu.core_type = #tpu.core_type<tc>, window_params = [{transform_indices = @transform_0, window_bounds = array<i64: 8>}, {transform_indices = @transform_1, window_bounds = array<i64: 1, 3, 8, 128>}, {transform_indices = @transform_2, window_bounds = array<i64: 1, 2, 8, 128>}]} {
    %c0 = arith.constant 0 : index
    %c0_0 = arith.constant 0 : index
    %c0_1 = arith.constant 0 : index
    %c0_2 = arith.constant 0 : index
    %0 = vector.load %arg3[%c0, %c0_0, %c0_1, %c0_2] : memref<1x3x8x128xf32, #tpu.memory_space<vmem>>, vector<1x1x8x128xf32>
    %1 = vector.shape_cast %0 : vector<1x1x8x128xf32> to vector<8x128xf32>
    %c0_3 = arith.constant 0 : index
    %c1 = arith.constant 1 : index
    %c0_4 = arith.constant 0 : index
    %c0_5 = arith.constant 0 : index
    %2 = vector.load %arg3[%c0_3, %c1, %c0_4, %c0_5] : memref<1x3x8x128xf32, #tpu.memory_space<vmem>>, vector<1x1x8x128xf32>
    %3 = vector.shape_cast %2 : vector<1x1x8x128xf32> to vector<8x128xf32>
    %c0_6 = arith.constant 0 : index
    %c2 = arith.constant 2 : index
    %c0_7 = arith.constant 0 : index
    %c0_8 = arith.constant 0 : index
    %4 = vector.load %arg3[%c0_6, %c2, %c0_7, %c0_8] : memref<1x3x8x128xf32, #tpu.memory_space<vmem>>, vector<1x1x8x128xf32>
    %5 = vector.shape_cast %4 : vector<1x1x8x128xf32> to vector<8x128xf32>
    %c0_9 = arith.constant 0 : index
    %6 = memref.load %arg2[%c0_9] : memref<8xf32, #tpu.memory_space<smem>>
    %7 = vector.broadcast %6 : f32 to vector<8x128xf32>
    %8 = arith.mulf %1, %7 : vector<8x128xf32>
    %c1_10 = arith.constant 1 : index
    %9 = memref.load %arg2[%c1_10] : memref<8xf32, #tpu.memory_space<smem>>
    %10 = vector.broadcast %9 : f32 to vector<8x128xf32>
    %11 = arith.mulf %3, %10 : vector<8x128xf32>
    %12 = arith.addf %8, %11 : vector<8x128xf32>
    %c2_11 = arith.constant 2 : index
    %13 = memref.load %arg2[%c2_11] : memref<8xf32, #tpu.memory_space<smem>>
    %14 = vector.broadcast %13 : f32 to vector<8x128xf32>
    %15 = arith.mulf %5, %14 : vector<8x128xf32>
    %16 = arith.addf %12, %15 : vector<8x128xf32>
    %c6 = arith.constant 6 : index
    %17 = memref.load %arg2[%c6] : memref<8xf32, #tpu.memory_space<smem>>
    %18 = vector.broadcast %17 : f32 to vector<8x128xf32>
    %19 = arith.addf %16, %18 : vector<8x128xf32>
    %c0_12 = arith.constant 0 : index
    %c0_13 = arith.constant 0 : index
    %c0_14 = arith.constant 0 : index
    %c0_15 = arith.constant 0 : index
    %20 = vector.load %arg4[%c0_12, %c0_13, %c0_14, %c0_15] : memref<1x2x8x128xf32, #tpu.memory_space<vmem>>, vector<1x1x8x128xf32>
    %21 = vector.shape_cast %20 : vector<1x1x8x128xf32> to vector<8x128xf32>
    %22 = vector.shape_cast %19 : vector<8x128xf32> to vector<1x1x8x128xf32>
    tpu.vector_store %arg4[%c0_12, %c0_13, %c0_14, %c0_15], %22 {strides = array<i32>} : memref<1x2x8x128xf32, #tpu.memory_space<vmem>>, vector<1x1x8x128xf32>,
    %c3 = arith.constant 3 : index
    %23 = memref.load %arg2[%c3] : memref<8xf32, #tpu.memory_space<smem>>
    %24 = vector.broadcast %23 : f32 to vector<8x128xf32>
    %25 = arith.mulf %1, %24 : vector<8x128xf32>
    %c4 = arith.constant 4 : index
    %26 = memref.load %arg2[%c4] : memref<8xf32, #tpu.memory_space<smem>>
    %27 = vector.broadcast %26 : f32 to vector<8x128xf32>
    %28 = arith.mulf %3, %27 : vector<8x128xf32>
    %29 = arith.addf %25, %28 : vector<8x128xf32>
    %c5 = arith.constant 5 : index
    %30 = memref.load %arg2[%c5] : memref<8xf32, #tpu.memory_space<smem>>
    %31 = vector.broadcast %30 : f32 to vector<8x128xf32>
    %32 = arith.mulf %5, %31 : vector<8x128xf32>
    %33 = arith.addf %29, %32 : vector<8x128xf32>
    %c7 = arith.constant 7 : index
    %34 = memref.load %arg2[%c7] : memref<8xf32, #tpu.memory_space<smem>>
    %35 = vector.broadcast %34 : f32 to vector<8x128xf32>
    %36 = arith.addf %33, %35 : vector<8x128xf32>
    %c0_16 = arith.constant 0 : index
    %c1_17 = arith.constant 1 : index
    %c0_18 = arith.constant 0 : index
    %c0_19 = arith.constant 0 : index
    %37 = vector.load %arg4[%c0_16, %c1_17, %c0_18, %c0_19] : memref<1x2x8x128xf32, #tpu.memory_space<vmem>>, vector<1x1x8x128xf32>
    %38 = vector.shape_cast %37 : vector<1x1x8x128xf32> to vector<8x128xf32>
    %39 = vector.shape_cast %36 : vector<8x128xf32> to vector<1x1x8x128xf32>
    tpu.vector_store %arg4[%c0_16, %c1_17, %c0_18, %c0_19], %39 {strides = array<i32>} : memref<1x2x8x128xf32, #tpu.memory_space<vmem>>, vector<1x1x8x128xf32>,
    return
  }
  func.func @transform_0(%arg0: i32, %arg1: i32) -> i32 {
    %c0_i32 = arith.constant 0 : i32
    %c0_i32_0 = arith.constant 0 : i32
    return %c0_i32 : i32
  }
  func.func @transform_1(%arg0: i32, %arg1: i32) -> (i32, i32, i32, i32) {
    %c0_i32 = arith.constant 0 : i32
    %c0_i32_0 = arith.constant 0 : i32
    %c0_i32_1 = arith.constant 0 : i32
    return %arg0, %c0_i32, %arg1, %c0_i32_0 : i32, i32, i32, i32
  }
  func.func @transform_2(%arg0: i32, %arg1: i32) -> (i32, i32, i32, i32) {
    %c0_i32 = arith.constant 0 : i32
    %c0_i32_0 = arith.constant 0 : i32
    %c0_i32_1 = arith.constant 0 : i32
    return %arg0, %c0_i32, %arg1, %c0_i32_0 : i32, i32, i32, i32
  }
}

</mosaic_0001>

<llo_original>
// kernel: binary_ensemble_forward.1
$region0: #{binary_ensemble_forward.1}
  #allocation0 [shape = 'u32[]', space=smem, size = 0x4, offset = 0x4, fixed_abs, tag = 'smem constant byte address 0x4 - core index']
  #allocation1 [shape = 'u32[144,128]{1,0:T(1,128)}', space=vmem, size = 0x12000, scoped, tag = 'internal scratch']
  %s0 = inlined_call_operand.vmem [shape: f32[8], index: 0, kind: input, shape index: {}]
  %s1 = inlined_call_operand.vmem [shape: f32[2,3,8,128], index: 1, kind: input, shape index: {}]
  %s2 = inlined_call_operand.vmem [shape: f32[2,2,8,128], index: 2, kind: output, shape index: {}]
  %s3 = sld [smem:[#allocation0]]
  $region45: #{binary_ensemble_forward.1} parent=0
    _
  %s5 = ssub.s32 1, %s3
  %s6 = scalar_select 0, %s5, %s3
  $region1: #{binary_ensemble_forward.1} parent=0
    #allocation2 [shape = 'u8[512]{0}', space=smem, size = 0x200, scoped, tag = 'input window, operand 0, single buffered']
    #allocation3 [shape = 's32[2]{0}', space=sflag, size = 0x8, scoped, tag = 'scoped memory for binary_ensemble_forward.1']
    %7 = vsyncpa [#allocation3], 0
    loop: start=0, step=1, limit=4
    $region2: #{binary_ensemble_forward.1} parent=1 // loop_pre_header
      _
    $region3: #{binary_ensemble_forward.1} parent=1 // loop_header
      %s9 = sphi 0, %s13
      %p10 = scmp.ge.s32.totalorder %s9, 4
      %s16 = sphi 0, %s28
      %s17 = sphi 0, %s24
      %s18 = sphi 0, %s16
      %s19 = sphi 0, %s17
      %s20 = sphi 0, %s18
      %s21 = sphi 0, %s19
      %s29 = sphi 0, %s29
      %s31 = sphi 0, %s29
      %s32 = sphi 0, %s31
      %s46 = sphi 0, %s32
      %s54 = sphi 0, %s56
      %s57 = sphi 0, %s54
      %s58 = sphi 0, %s57
      %s74 = sphi 0, %s58
      %s82 = sphi 0, %s84
      %s85 = sphi 0, %s82
      %s86 = sphi 0, %s85
      %s102 = sphi 0, %s86
    $region4: #{binary_ensemble_forward.1} parent=1 // loop_header_branch
      %12 = sbr.rel (%p10) target = $region8
    $region5: #{binary_ensemble_forward.1} parent=1 // loop_body
      %s14 = ssub.s32 %s9, 1
      %s15 = ssub.s32 %s9, 2
      %s22 = sadd.s32 1, %s17
      %p23 = scmp.ge.s32.totalorder %s22, 1
      %s24 = scalar_select %p23, 0, %s22
      %s25 = sadd.s32 1, %s16
      %s26 = scalar_select %p23, %s25, %s16
      %p27 = scmp.ge.s32.totalorder %s26, 2
      %s28 = scalar_select %p27, 0, %s26
      %s30 = sadd.s32 %s29, 1
      %p33 = scmp.eq.s32.totalorder %s9, 1
      %p34 = scmp.ne.s32.totalorder %s29, %s31
      %p35 = scmp.eq.s32.totalorder %s9, 0
      %p36 = por %p34, %p35
      %p37 = scmp.ne.s32.totalorder %s29, %s31
      %p38 = scmp.eq.s32.totalorder %s14, 1
      %p39 = por %p37, %p38
      %p40 = scmp.ne.s32.totalorder %s31, %s32
      %p41 = scmp.eq.s32.totalorder %s14, 0
      %p42 = por %p40, %p41
      %p43 = scmp.ne.s32.totalorder %s31, %s32
      %p44 = scmp.eq.s32.totalorder %s15, 1
      %p45 = por %p43, %p44
      %p47 = scmp.ne.s32.totalorder %s32, %s46
      %p48 = scmp.eq.s32.totalorder %s15, 0
      %p49 = por %p47, %p48
      %s50 = ssub.s32 %s16, %s28
      %s51 = ssub.s32 %s17, %s24
      %s52 = sor.u32 %s50, %s51
      %p53 = scmp.eq.s32.totalorder %s52, 0
      %s55 = sadd.s32 %s54, 1
      %s56 = scalar_select %p53, %s54, %s55
      %p59 = pneg %p53
      %p60 = scmp.eq.s32.totalorder %s9, 1
      %p61 = por %p59, %p60
      %p62 = scmp.ne.s32.totalorder %s54, %s57
      %p63 = scmp.eq.s32.totalorder %s9, 0
      %p64 = por %p62, %p63
      %p65 = scmp.ne.s32.totalorder %s54, %s57
      %p66 = scmp.eq.s32.totalorder %s14, 1
      %p67 = por %p65, %p66
      %p68 = scmp.ne.s32.totalorder %s57, %s58
      %p69 = scmp.eq.s32.totalorder %s14, 0
      %p70 = por %p68, %p69
      %p71 = scmp.ne.s32.totalorder %s57, %s58
      %p72 = scmp.eq.s32.totalorder %s15, 1
      %p73 = por %p71, %p72
      %p75 = scmp.ne.s32.totalorder %s58, %s74
      %p76 = scmp.eq.s32.totalorder %s15, 0
      %p77 = por %p75, %p76
      %s78 = ssub.s32 %s16, %s28
      %s79 = ssub.s32 %s17, %s24
      %s80 = sor.u32 %s78, %s79
      %p81 = scmp.eq.s32.totalorder %s80, 0
      %s83 = sadd.s32 %s82, 1
      %s84 = scalar_select %p81, %s82, %s83
      %p87 = pneg %p81
      %p88 = scmp.eq.s32.totalorder %s9, 1
      %p89 = por %p87, %p88
      %p90 = scmp.ne.s32.totalorder %s82, %s85
      %p91 = scmp.eq.s32.totalorder %s9, 0
      %p92 = por %p90, %p91
      %p93 = scmp.ne.s32.totalorder %s82, %s85
      %p94 = scmp.eq.s32.totalorder %s14, 1
      %p95 = por %p93, %p94
      %p96 = scmp.ne.s32.totalorder %s85, %s86
      %p97 = scmp.eq.s32.totalorder %s14, 0
      %p98 = por %p96, %p97
      %p99 = scmp.ne.s32.totalorder %s85, %s86
      %p100 = scmp.eq.s32.totalorder %s15, 1
      %p101 = por %p99, %p100
      %p103 = scmp.ne.s32.totalorder %s86, %s102
      %p104 = scmp.eq.s32.totalorder %s15, 0
      %p105 = por %p103, %p104
      %p106 = scmp.le.s32.totalorder 1, %s9
      %p107 = scmp.lt.s32.totalorder %s9, 3
      %p108 = pnand %p106, %p107
      %p109 = pneg %p108
      // Predicated region
      $region9: #{binary_ensemble_forward.1} parent=5 // pred_check
        _
      $region10: #{binary_ensemble_forward.1} parent=5 // pred_check_branch
        %111 = sbr.rel (%p108) target = $region12
      $region11: #{binary_ensemble_forward.1} parent=5 // pred_region
        %s112 = ssub.s32 %s9, 1
        // Predicated region
        $region13: #{binary_ensemble_forward.1} parent=11 // pred_check
          %p113 = pneg %p42
        $region14: #{binary_ensemble_forward.1} parent=11 // pred_check_branch
          %115 = sbr.rel (%p113) target = $region16
        $region15: #{binary_ensemble_forward.1} parent=11 // pred_region
          %s117 = ssub.s32 16, 16
          %118 = vsyncadd [#allocation3], %s117
          %s120 = sshll.u32 %s0, 4
          %s121 = int_to_ptr.vmem [resolvable:$true] %s120
          %123 = dma.vmem_to_smem %s121, 16, [#allocation2], [#allocation3]
        $region16: #{binary_ensemble_forward.1} parent=11 // pred_fallthru
          _
      $region12: #{binary_ensemble_forward.1} parent=5 // pred_fallthru
        _
      %p124 = scmp.lt.s32.totalorder %s9, 2
      // Predicated region
      $region17: #{binary_ensemble_forward.1} parent=5 // pred_check
        %p125 = pneg %p124
      $region18: #{binary_ensemble_forward.1} parent=5 // pred_check_branch
        %127 = sbr.rel (%p125) target = $region20
      $region19: #{binary_ensemble_forward.1} parent=5 // pred_region
        // Predicated region
        $region21: #{binary_ensemble_forward.1} parent=19 // pred_check
          %p128 = pneg %p64
        $region22: #{binary_ensemble_forward.1} parent=19 // pred_check_branch
          %130 = sbr.rel (%p128) target = $region24
        $region23: #{binary_ensemble_forward.1} parent=19 // pred_region
          %p131 = scmp.lt.s32.totalorder %s16, 1
          %s132 = scalar_select %p131, %s16, 1
          %p133 = scmp.lt.s32.totalorder %s17, 0
          %s134 = scalar_select %p133, %s17, 0
          %s135 = smul.addr %s132, 3
          %s136 = sadd.s32 %s134, %s135
          %s137 = smul.addr %s136, 8
          %s138 = scalar_lea.vmem %s1, %s137
        $region24: #{binary_ensemble_forward.1} parent=19 // pred_fallthru
          _
      $region20: #{binary_ensemble_forward.1} parent=5 // pred_fallthru
        _
      %p139 = scmp.le.s32.totalorder 1, %s9
      %p140 = scmp.lt.s32.totalorder %s9, 3
      %p141 = pnand %p139, %p140
      %p142 = pneg %p141
      // Predicated region
      $region25: #{binary_ensemble_forward.1} parent=5 // pred_check
        _
      $region26: #{binary_ensemble_forward.1} parent=5 // pred_check_branch
        %144 = sbr.rel (%p141) target = $region28
      $region27: #{binary_ensemble_forward.1} parent=5 // pred_region
        %s145 = ssub.s32 %s9, 1
        // Predicated region
        $region29: #{binary_ensemble_forward.1} parent=27 // pred_check
          %p146 = pneg %p42
        $region30: #{binary_ensemble_forward.1} parent=27 // pred_check_branch
          %148 = sbr.rel (%p146) target = $region32
        $region31: #{binary_ensemble_forward.1} parent=27 // pred_region
          %149 = dma.done [#allocation3], 16
        $region32: #{binary_ensemble_forward.1} parent=27 // pred_fallthru
          _
        %150 = sfence
        %p151 = pneg %p42
        %p152 = pneg %p39
        %p153 = scmp.lt.s32.totalorder %s18, 1
        %s154 = scalar_select %p153, %s18, 1
        %p155 = scmp.lt.s32.totalorder %s19, 0
        %s156 = scalar_select %p155, %s19, 0
        %s157 = smul.addr %s154, 3
        %s158 = sadd.s32 %s156, %s157
        %s159 = smul.addr %s158, 8
        %s160 = scalar_lea.vmem %s1, %s159
        %p161 = pneg %p70
        %p162 = pneg %p67
        %p163 = pneg %p98
        %p164 = pneg %p95
        %p165 = scmp.lt.s32.totalorder %s18, 1
        %s166 = scalar_select %p165, %s18, 1
        %p167 = scmp.lt.s32.totalorder %s19, 0
        %s168 = scalar_select %p167, %s19, 0
        %s169 = smul.addr %s166, 2
        %s170 = sadd.s32 %s168, %s169
        %s171 = smul.addr %s170, 8
        %s172 = scalar_lea.vmem %s2, %s171
        %p173 = scmp.lt.s32.totalorder %s18, 1
        %s174 = scalar_select %p173, %s18, 1
        %p175 = scmp.lt.s32.totalorder %s19, 0
        %s176 = scalar_select %p175, %s19, 0
        %s177 = smul.addr %s174, 3
        %s178 = sadd.s32 %s176, %s177
        %s179 = smul.addr %s178, 8
        %s180 = scalar_lea.vmem %s1, %s179
        %p181 = scmp.lt.s32.totalorder %s18, 1
        %s182 = scalar_select %p181, %s18, 1
        %p183 = scmp.lt.s32.totalorder %s19, 0
        %s184 = scalar_select %p183, %s19, 0
        %s185 = smul.addr %s182, 2
        %s186 = sadd.s32 %s184, %s185
        %s187 = smul.addr %s186, 8
        %s188 = scalar_lea.vmem %s2, %s187
        %v189 = vld [vmem:[%s180] sm:$0xff]
        %s190 = scalar_lea.vmem %s180, 8
        %v191 = vld [vmem:[%s190] sm:$0xff]
        %s192 = scalar_lea.vmem %s180, 16
        %v193 = vld [vmem:[%s192] sm:$0xff]
        %s194 = sld [smem:[#allocation2]]
        %v195 = vstv %s194
        %v196 = vmul.f32 %v189, %v195
        %s197 = sld [smem:[#allocation2 + $0x1]]
        %v198 = vstv %s197
        %v199 = vmul.f32 %v191, %v198
        %v200 = vadd.f32 %v196, %v199
        %s201 = sld [smem:[#allocation2 + $0x2]]
        %v202 = vstv %s201
        %v203 = vmul.f32 %v193, %v202
        %v204 = vadd.f32 %v200, %v203
        %s205 = sld [smem:[#allocation2 + $0x6]]
        %v206 = vstv %s205
        %v207 = vadd.f32 %v204, %v206
        %208 = vst [vmem:[%s188] sm:$0xff] %v207
        %s209 = sld [smem:[#allocation2 + $0x3]]
        %v210 = vstv %s209
        %v211 = vmul.f32 %v189, %v210
        %s212 = sld [smem:[#allocation2 + $0x4]]
        %v213 = vstv %s212
        %v214 = vmul.f32 %v191, %v213
        %v215 = vadd.f32 %v211, %v214
        %s216 = sld [smem:[#allocation2 + $0x5]]
        %v217 = vstv %s216
        %v218 = vmul.f32 %v193, %v217
        %v219 = vadd.f32 %v215, %v218
        %s220 = sld [smem:[#allocation2 + $0x7]]
        %v221 = vstv %s220
        %v222 = vadd.f32 %v219, %v221
        %s223 = scalar_lea.vmem %s188, 8
        %224 = vst [vmem:[%s223] sm:$0xff] %v222
        %p225 = scmp.lt.s32.totalorder %s18, 1
        %s226 = scalar_select %p225, %s18, 1
        %p227 = scmp.lt.s32.totalorder %s19, 0
        %s228 = scalar_select %p227, %s19, 0
        %s229 = smul.addr %s226, 2
        %s230 = sadd.s32 %s228, %s229
        %s231 = smul.addr %s230, 8
        %s232 = scalar_lea.vmem %s2, %s231
        // Predicated region
        $region33: #{binary_ensemble_forward.1} parent=27 // pred_check
          %p233 = pneg %p95
        $region34: #{binary_ensemble_forward.1} parent=27 // pred_check_branch
          %235 = sbr.rel (%p233) target = $region36
        $region35: #{binary_ensemble_forward.1} parent=27 // pred_region
          _
        $region36: #{binary_ensemble_forward.1} parent=27 // pred_fallthru
          _
      $region28: #{binary_ensemble_forward.1} parent=5 // pred_fallthru
        _
      %p236 = scmp.le.s32.totalorder 2, %s9
      // Predicated region
      $region37: #{binary_ensemble_forward.1} parent=5 // pred_check
        %p237 = pneg %p236
      $region38: #{binary_ensemble_forward.1} parent=5 // pred_check_branch
        %239 = sbr.rel (%p237) target = $region40
      $region39: #{binary_ensemble_forward.1} parent=5 // pred_region
        %s240 = ssub.s32 %s9, 2
        // Predicated region
        $region41: #{binary_ensemble_forward.1} parent=39 // pred_check
          %p241 = pneg %p101
        $region42: #{binary_ensemble_forward.1} parent=39 // pred_check_branch
          %243 = sbr.rel (%p241) target = $region44
        $region43: #{binary_ensemble_forward.1} parent=39 // pred_region
          %p244 = scmp.lt.s32.totalorder %s20, 1
          %s245 = scalar_select %p244, %s20, 1
          %p246 = scmp.lt.s32.totalorder %s21, 0
          %s247 = scalar_select %p246, %s21, 0
          %s248 = smul.addr %s245, 2
          %s249 = sadd.s32 %s247, %s248
          %s250 = smul.addr %s249, 8
          %s251 = scalar_lea.vmem %s2, %s250
        $region44: #{binary_ensemble_forward.1} parent=39 // pred_fallthru
          _
      $region40: #{binary_ensemble_forward.1} parent=5 // pred_fallthru
        _
    $region6: #{binary_ensemble_forward.1} parent=1 // loop_footer
      %s13 = sadd.s32 1, %s9
    $region7: #{binary_ensemble_forward.1} parent=1 // loop_footer_branch
      %8 = sbr.rel target = $region3
    $region8: #{binary_ensemble_forward.1} parent=1 // loop_exit
      _
    %252 = vsyncpa [#allocation3], 1
    %s253 = scalar_lea.sflag [#allocation3], 1
    %254 = vsyncpa %s253, 1

</llo_original>
